<compile_context>
chip_gen: v6e
topology: v6e:2x2x1
jax: 0.10.0
libtpu: 0.0.40
codegen_flags: <defaults>
</compile_context>

<pallas_src>
import jax
import jax.numpy as jnp
from jax.experimental import pallas as pl
from jax.experimental.pallas import tpu as pltpu


def _kmeans_predict_kernel(x_ref, ct_ref, csq_ref, o_ref):
    # x_ref:   (tm, D)  input rows for this tile
    # ct_ref:  (D, Kp)  centroids, pre-transposed, K padded to lane width
    # csq_ref: (1, Kp)  ||c||^2 per centroid (+inf for padded columns)
    # o_ref:   (1, tm)  int32 labels (lane-dense store)
    x = x_ref[...]
    ct = ct_ref[...]
    kp = ct.shape[1]

    # score = ||c||^2 - 2 * x.c   (||x||^2 dropped: constant per row)
    dots = jnp.dot(x, ct, preferred_element_type=jnp.float32)        # (tm, Kp)
    dist = csq_ref[...] - 2.0 * dots                                  # (tm, Kp)

    # argmin over Kp with first-index tie-break (matches numpy argmin).
    min_d = jnp.min(dist, axis=-1, keepdims=True)                     # (tm, 1)
    idx = jax.lax.broadcasted_iota(jnp.int32, dist.shape, 1)          # (tm, Kp)
    labels = jnp.min(jnp.where(dist == min_d, idx, kp), axis=-1)      # (tm,)

    o_ref[...] = labels[None, :].astype(jnp.int32)


def kmeans_quantize(x, centroids, *, tm=512, use_bf16=False):
    """Pallas equivalent of KMeansQuantizer.forward.

    x:         (T, D) float32 feature frames
    centroids: (K, D) float32 cluster centers (the loaded kmeans codebook)
    returns    (T,)   int32 nearest-centroid indices
    """
    T, D = x.shape
    K, Dc = centroids.shape
    assert D == Dc

    # Row tile: large (amortizes per-step overhead), multiple of 8, no bigger
    # than T rounded up to 8, and capped by a v7x-safe VMEM budget.
    tm = int(max(8, min(tm, -(-T // 8) * 8)))
    tm = (tm // 8) * 8
    k_pad = int(max(128, -(-K // 128) * 128))

    def _vmem_bytes(t):
        itemsize = 2 if use_bf16 else 4
        return (2 * t * D * itemsize      # double-buffered x tiles
                + D * k_pad * itemsize    # resident centroid table
                + k_pad * 4               # resident ||c||^2 row
                + t * k_pad * 4           # dist tile
                + 2 * t * 4)              # double-buffered label tiles

    # Stay well under the 32 MiB default scoped VMEM (v7x: 64 MiB physical).
    while tm > 8 and _vmem_bytes(tm) > 24 * 1024 * 1024:
        tm = max(8, (tm // 2) // 8 * 8)

    n_tiles = pl.cdiv(T, tm)
    t_pad = n_tiles * tm

    compute_dtype = jnp.bfloat16 if use_bf16 else jnp.float32
    xp = x.astype(compute_dtype)
    if t_pad != T:
        xp = jnp.pad(xp, ((0, t_pad - T), (0, 0)))

    # Hoisted centroid preprocessing: done once in the wrapper, not per step.
    ct = jnp.zeros((D, k_pad), compute_dtype).at[:, :K].set(
        centroids.T.astype(compute_dtype))
    c_sq = jnp.sum(centroids.astype(jnp.float32) ** 2, axis=-1)       # (K,)
    c_sq_pad = jnp.full((1, k_pad), jnp.inf, jnp.float32).at[0, :K].set(c_sq)

    # TODO(synk): for very large codebooks (K*D*4 >> a few MiB) add a second
    # "arbitrary" grid axis over K-tiles with a running (min, argmin) scratch.
    out = pl.pallas_call(
        _kmeans_predict_kernel,
        out_shape=jax.ShapeDtypeStruct((n_tiles, tm), jnp.int32),
        grid_spec=pltpu.PrefetchScalarGridSpec(
            num_scalar_prefetch=0,
            grid=(n_tiles,),
            in_specs=[
                pl.BlockSpec((tm, D), lambda i: (i, 0)),        # x row tile
                pl.BlockSpec((D, k_pad), lambda i: (0, 0)),     # centroid table
                pl.BlockSpec((1, k_pad), lambda i: (0, 0)),     # ||c||^2 row
            ],
            out_specs=pl.BlockSpec((1, tm), lambda i: (i, 0)),  # lane-dense
        ),
        compiler_params=pltpu.CompilerParams(
            dimension_semantics=("parallel",),
        ),
    )(xp, ct, c_sq_pad)

    # TODO(synk): sklearn's predict returns int64 labels on CPU; int32 is used
    # here (identical values; TPU has no native int64 vector path).
    return out.reshape(t_pad)[:T]


if __name__ == "__main__":
    key = jax.random.PRNGKey(0)
    kx, kc = jax.random.split(key)

    # Small shapes consistent with the module: T frames of D-dim features,
    # K-cluster kmeans codebook (deterministic synthetic centroids).
    T, D, K = 64, 32, 16
    x = jax.random.normal(kx, (T, D), dtype=jnp.float32)
    centroids = jax.random.normal(kc, (K, D), dtype=jnp.float32)

    labels = jax.block_until_ready(kmeans_quantize(x, centroids))

    # Pure-JAX reference check (nearest centroid, full squared euclidean).
    ref_dist = (
        jnp.sum(x * x, axis=-1, keepdims=True)
        - 2.0 * x @ centroids.T
        + jnp.sum(centroids * centroids, axis=-1)[None, :]
    )
    ref = jnp.argmin(ref_dist, axis=-1).astype(jnp.int32)
    assert labels.shape == (T,)
    assert labels.dtype == jnp.int32
    assert bool(jnp.all(labels == ref))

    print("KERNEL_OK")
</pallas_src>

<mosaic_0001>
module attributes {stable_mosaic.version = 11 : i64} {
  func.func @_kmeans_predict_kernel(%arg0: i32, %arg1: memref<64x32xf32, #tpu.memory_space<vmem>>, %arg2: memref<32x128xf32, #tpu.memory_space<vmem>>, %arg3: memref<1x128xf32, #tpu.memory_space<vmem>>, %arg4: memref<1x64xi32, #tpu.memory_space<vmem>>) attributes {dimension_semantics = [#tpu.dimension_semantics<parallel>], iteration_bounds = array<i64: 1>, scalar_prefetch = 0 : i64, scratch_operands = 0 : i64, tpu.core_type = #tpu.core_type<tc>, window_params = [{transform_indices = @transform_0, window_bounds = array<i64: 64, 32>}, {pipeline_mode = #tpu.pipeline_mode<synchronous>, transform_indices = @transform_1, window_bounds = array<i64: 32, 128>}, {pipeline_mode = #tpu.pipeline_mode<synchronous>, transform_indices = @transform_2, window_bounds = array<i64: 1, 128>}, {transform_indices = @transform_3, window_bounds = array<i64: 1, 64>}]} {
    %c0 = arith.constant 0 : index
    %c0_0 = arith.constant 0 : index
    %0 = vector.load %arg1[%c0, %c0_0] : memref<64x32xf32, #tpu.memory_space<vmem>>, vector<64x32xf32>
    %c0_1 = arith.constant 0 : index
    %c0_2 = arith.constant 0 : index
    %1 = vector.load %arg2[%c0_1, %c0_2] : memref<32x128xf32, #tpu.memory_space<vmem>>, vector<32x128xf32>
    %cst = arith.constant dense<0.000000e+00> : vector<64x128xf32>
    %2 = tpu.matmul %0, %1, %cst {dimension_numbers = #tpu.dot_dimension_numbers<[1], [0], [0], [1], [0, 0, 1, 1], [], []>} : vector<64x32xf32>, vector<32x128xf32>, vector<64x128xf32> -> vector<64x128xf32>
    %c0_3 = arith.constant 0 : index
    %c0_4 = arith.constant 0 : index
    %3 = vector.load %arg3[%c0_3, %c0_4] : memref<1x128xf32, #tpu.memory_space<vmem>>, vector<1x128xf32>
    %cst_5 = arith.constant 2.000000e+00 : f32
    %4 = vector.broadcast %cst_5 : f32 to vector<64x128xf32>
    %5 = arith.mulf %4, %2 : vector<64x128xf32>
    %6 = vector.broadcast %3 : vector<1x128xf32> to vector<64x128xf32>
    %7 = arith.subf %6, %5 : vector<64x128xf32>
    %cst_6 = arith.constant dense<0x7F800000> : vector<64xf32>
    %8 = vector.multi_reduction <minimumf>, %7, %cst_6 [1] : vector<64x128xf32> to vector<64xf32>
    %9 = vector.shape_cast %8 : vector<64xf32> to vector<64x1xf32>
    %10 = tpu.iota {dimensions = array<i32: 1>} : vector<64x128xi32>
    %11 = vector.broadcast %9 : vector<64x1xf32> to vector<64x128xf32>
    %12 = arith.cmpf oeq, %7, %11 : vector<64x128xf32>
    %c128_i32 = arith.constant 128 : i32
    %13 = vector.broadcast %c128_i32 : i32 to vector<64x128xi32>
    %14 = arith.select %12, %10, %13 : vector<64x128xi1>, vector<64x128xi32>
    %cst_7 = arith.constant dense<2147483647> : vector<64xi32>
    %15 = vector.multi_reduction <minsi>, %14, %cst_7 [1] : vector<64x128xi32> to vector<64xi32>
    %16 = vector.shape_cast %15 : vector<64xi32> to vector<1x64xi32>
    %c0_8 = arith.constant 0 : index
    %c0_9 = arith.constant 0 : index
    %17 = vector.load %arg4[%c0_8, %c0_9] : memref<1x64xi32, #tpu.memory_space<vmem>>, vector<1x64xi32>
    tpu.vector_store %arg4[%c0_8, %c0_9], %16 {strides = array<i32>} : memref<1x64xi32, #tpu.memory_space<vmem>>, vector<1x64xi32>,
    return
  }
  func.func @transform_0(%arg0: i32) -> (i32, i32) {
    %c0_i32 = arith.constant 0 : i32
    %c0_i32_0 = arith.constant 0 : i32
    return %arg0, %c0_i32 : i32, i32
  }
  func.func @transform_1(%arg0: i32) -> (i32, i32) {
    %c0_i32 = arith.constant 0 : i32
    %c0_i32_0 = arith.constant 0 : i32
    %c0_i32_1 = arith.constant 0 : i32
    return %c0_i32, %c0_i32_0 : i32, i32
  }
  func.func @transform_2(%arg0: i32) -> (i32, i32) {
    %c0_i32 = arith.constant 0 : i32
    %c0_i32_0 = arith.constant 0 : i32
    %c0_i32_1 = arith.constant 0 : i32
    return %c0_i32, %c0_i32_0 : i32, i32
  }
  func.func @transform_3(%arg0: i32) -> (i32, i32) {
    %c0_i32 = arith.constant 0 : i32
    %c0_i32_0 = arith.constant 0 : i32
    return %arg0, %c0_i32 : i32, i32
  }
}

</mosaic_0001>

<llo_original>
// kernel: tpu_custom_call.1
$region0: #{tpu_custom_call.1}
  #allocation0 [shape = 'u32[]', space=smem, size = 0x4, offset = 0x4, fixed_abs, tag = 'smem constant byte address 0x4 - core index']
  #allocation1 [shape = 'u32[144,128]{1,0:T(1,128)}', space=vmem, size = 0x12000, scoped, tag = 'internal scratch']
  %s0 = inlined_call_operand.vmem [shape: f32[64,32], index: 0, kind: input, shape index: {}]
  %s1 = inlined_call_operand.vmem [shape: f32[32,128], index: 1, kind: input, shape index: {}]
  %s2 = inlined_call_operand.vmem [shape: f32[1,128], index: 2, kind: input, shape index: {}]
  %s3 = inlined_call_operand.hbm [shape: s32[1,64], index: 3, kind: output, shape index: {}]
  %s4 = sld [smem:[#allocation0]]
  $region22: #{tpu_custom_call.1} parent=0
    _
  %s6 = ssub.s32 1, %s4
  %s7 = scalar_select 0, %s6, %s4
  $region1: #{tpu_custom_call.1} parent=0
    #allocation2 [shape = 'u8[512]{0}', space=vmem, size = 0x400, scoped, tag = 'output window, operand 0, single buffered']
    #allocation3 [shape = 's32[1]{0}', space=sflag, size = 0x4, scoped, tag = 'scoped memory for tpu_custom_call.1']
    %8 = vsyncpa [#allocation3], 0
    // Predicated region
    $region2: #{tpu_custom_call.1} parent=1 // pred_check
      _
    $region3: #{tpu_custom_call.1} parent=1 // pred_check_branch
      %10 = sbr.rel (0) target = $region5
    $region4: #{tpu_custom_call.1} parent=1 // pred_region
      _
    $region5: #{tpu_custom_call.1} parent=1 // pred_fallthru
      _
    // Predicated region
    $region6: #{tpu_custom_call.1} parent=1 // pred_check
      _
    $region7: #{tpu_custom_call.1} parent=1 // pred_check_branch
      %12 = sbr.rel (0) target = $region9
    $region8: #{tpu_custom_call.1} parent=1 // pred_region
      _
    $region9: #{tpu_custom_call.1} parent=1 // pred_fallthru
      _
    // Predicated region
    $region10: #{tpu_custom_call.1} parent=1 // pred_check
      _
    $region11: #{tpu_custom_call.1} parent=1 // pred_check_branch
      %14 = sbr.rel (0) target = $region13
    $region12: #{tpu_custom_call.1} parent=1 // pred_region
      _
    $region13: #{tpu_custom_call.1} parent=1 // pred_fallthru
      _
    %v15 = vld [vmem:[%s0] sm:$0xff]
    %v16 = vld [vmem:[%s0 + $0x8] sm:$0xff]
    %v17 = vld [vmem:[%s0 + $0x10] sm:$0xff]
    %v18 = vld [vmem:[%s0 + $0x18] sm:$0xff]
    %v19 = vld [vmem:[%s0 + $0x20] sm:$0xff]
    %v20 = vld [vmem:[%s0 + $0x28] sm:$0xff]
    %v21 = vld [vmem:[%s0 + $0x30] sm:$0xff]
    %v22 = vld [vmem:[%s0 + $0x38] sm:$0xff]
    %v23 = vld [vmem:[%s1] sm:$0xff]
    %v24 = vld [vmem:[%s1 + $0x8] sm:$0xff]
    %v25 = vld [vmem:[%s1 + $0x10] sm:$0xff]
    %v26 = vld [vmem:[%s1 + $0x18] sm:$0xff]
    %vm27 = vcmask 261120
    %v29 = vsel %vm27, %v15, 0
    %v32 = vsel %vm27, %v16, 0
    %v35 = vsel %vm27, %v17, 0
    %v38 = vsel %vm27, %v18, 0
    %v41 = vsel %vm27, %v19, 0
    %v44 = vsel %vm27, %v20, 0
    %v47 = vsel %vm27, %v21, 0
    %v50 = vsel %vm27, %v22, 0
    %52 = vmatprep.subr.mxu0 0.0
    %53 = vmatpush1.msra.mxu0 0.0
    %54 = vmatprep.subr.mxu0 0.0
    %55 = vmatpush1.msra.mxu0 0.0
    %56 = vmatprep.subr.mxu0 0.0
    %57 = vmatpush1.msra.mxu0 0.0
    %58 = vmatprep.subr.mxu0 0.0
    %59 = vmatpush1.msra.mxu0 0.0
    %60 = vmatprep.subr.mxu0 0.0
    %61 = vmatpush1.msra.mxu0 0.0
    %62 = vmatprep.subr.mxu0 0.0
    %63 = vmatpush1.msra.mxu0 0.0
    %64 = vmatprep.subr.mxu0 0.0
    %65 = vmatpush1.msra.mxu0 0.0
    %66 = vmatprep.subr.mxu0 0.0
    %67 = vmatpush1.msra.mxu0 0.0
    %68 = vmatprep.subr.mxu0 0.0
    %69 = vmatpush1.msra.mxu0 0.0
    %70 = vmatprep.subr.mxu0 0.0
    %71 = vmatpush1.msra.mxu0 0.0
    %72 = vmatprep.subr.mxu0 0.0
    %73 = vmatpush1.msra.mxu0 0.0
    %74 = vmatprep.subr.mxu0 0.0
    %75 = vmatpush1.msra.mxu0 0.0
    %76 = vmatprep.subr.mxu0 0.0
    %77 = vmatpush1.msra.mxu0 %v26
    %78 = vmatprep.subr.mxu0 0.0
    %79 = vmatpush1.msra.mxu0 %v25
    %80 = vmatprep.subr.mxu0 0.0
    %81 = vmatpush1.msra.mxu0 %v24
    %82 = vmatprep.subr.mxu0 0.0
    %83 = vmatpush1.msra.mxu0 %v23
    %84 = vmatprep.subr.mxu0 0.0
    %85 = vmatpush2.msra.mxu0 0.0
    %86 = vmatprep.subr.mxu0 0.0
    %87 = vmatpush2.msra.mxu0 0.0
    %88 = vmatprep.subr.mxu0 0.0
    %89 = vmatpush2.msra.mxu0 0.0
    %90 = vmatprep.subr.mxu0 0.0
    %91 = vmatpush2.msra.mxu0 0.0
    %92 = vmatprep.subr.mxu0 0.0
    %93 = vmatpush2.msra.mxu0 0.0
    %94 = vmatprep.subr.mxu0 0.0
    %95 = vmatpush2.msra.mxu0 0.0
    %96 = vmatprep.subr.mxu0 0.0
    %97 = vmatpush2.msra.mxu0 0.0
    %98 = vmatprep.subr.mxu0 0.0
    %99 = vmatpush2.msra.mxu0 0.0
    %100 = vmatprep.subr.mxu0 0.0
    %101 = vmatpush2.msra.mxu0 0.0
    %102 = vmatprep.subr.mxu0 0.0
    %103 = vmatpush2.msra.mxu0 0.0
    %104 = vmatprep.subr.mxu0 0.0
    %105 = vmatpush2.msra.mxu0 0.0
    %106 = vmatprep.subr.mxu0 0.0
    %107 = vmatpush2.msra.mxu0 0.0
    %108 = vmatprep.subr.mxu0 0.0
    %109 = vmatpush2.msra.mxu0 0.0
    %110 = vmatprep.subr.mxu0 0.0
    %111 = vmatpush2.msra.mxu0 0.0
    %112 = vmatprep.subr.mxu0 0.0
    %113 = vmatpush2.msra.mxu0 0.0
    %114 = vmatprep.subr.mxu0 0.0
    %115 = vmatpush2.msra.mxu0 0.0
    %116 = vmatprep.mubr.f32.mxu0 0.0
    %117 = vmatmul.mubr.f32.gmra.mxu0 %v29
    %v118 = vpop.f32.mrf.mxu0
    %v119 = vadd.f32 0.0, %v118
    %v120 = vpop.f32.mrf.mxu0
    %121 = vmatprep.mubr.f32.mxu0 0.0
    %122 = vmatmul.mubr.f32.gmra.mxu0 %v32
    %v123 = vpop.f32.mrf.mxu0
    %v124 = vadd.f32 0.0, %v123
    %v125 = vpop.f32.mrf.mxu0
    %126 = vmatprep.mubr.f32.mxu0 0.0
    %127 = vmatmul.mubr.f32.gmra.mxu0 %v35
    %v128 = vpop.f32.mrf.mxu0
    %v129 = vadd.f32 0.0, %v128
    %v130 = vpop.f32.mrf.mxu0
    %131 = vmatprep.mubr.f32.mxu0 0.0
    %132 = vmatmul.mubr.f32.gmra.mxu0 %v38
    %v133 = vpop.f32.mrf.mxu0
    %v134 = vadd.f32 0.0, %v133
    %v135 = vpop.f32.mrf.mxu0
    %136 = vmatprep.mubr.f32.mxu0 0.0
    %137 = vmatmul.mubr.f32.gmra.mxu0 %v41
    %v138 = vpop.f32.mrf.mxu0
    %v139 = vadd.f32 0.0, %v138
    %v140 = vpop.f32.mrf.mxu0
    %141 = vmatprep.mubr.f32.mxu0 0.0
    %142 = vmatmul.mubr.f32.gmra.mxu0 %v44
    %v143 = vpop.f32.mrf.mxu0
    %v144 = vadd.f32 0.0, %v143
    %v145 = vpop.f32.mrf.mxu0
    %146 = vmatprep.mubr.f32.mxu0 0.0
    %147 = vmatmul.mubr.f32.gmra.mxu0 %v47
    %v148 = vpop.f32.mrf.mxu0
    %v149 = vadd.f32 0.0, %v148
    %v150 = vpop.f32.mrf.mxu0
    %151 = vmatprep.mubr.f32.mxu0 0.0
    %152 = vmatmul.mubr.f32.gmra.mxu0 %v50
    %v153 = vpop.f32.mrf.mxu0
    %v154 = vadd.f32 0.0, %v153
    %v155 = vpop.f32.mrf.mxu0
    %156 = vdwg.mxu0
    %v157 = vld [vmem:[%s2] sm:$0x1]
    %v158 = vmul.f32 %v119, 2.0
    %v159 = vmul.f32 %v124, 2.0
    %v160 = vmul.f32 %v129, 2.0
    %v161 = vmul.f32 %v134, 2.0
    %v162 = vmul.f32 %v139, 2.0
    %v163 = vmul.f32 %v144, 2.0
    %v164 = vmul.f32 %v149, 2.0
    %v165 = vmul.f32 %v154, 2.0
    %v167 = vlaneseq
    %v168 = vshrl.u32 %v167, 7
    %v169 = vsub.s32 0, %v168
    %v170 = vrot.slane %v157, %v169
    %v172 = vsub.f32 %v170, %v158
    %v173 = vsub.f32 %v170, %v159
    %v174 = vsub.f32 %v170, %v160
    %v175 = vsub.f32 %v170, %v161
    %v176 = vsub.f32 %v170, %v162
    %v177 = vsub.f32 %v170, %v163
    %v178 = vsub.f32 %v170, %v164
    %v179 = vsub.f32 %v170, %v165
    %180 = vmin.xlane.f32.xlu0 %v172
    %v181 = vpop.xlane.xlu0 %180
    %182 = vmin.xlane.f32.xlu0 %v173
    %v183 = vpop.xlane.xlu0 %182
    %184 = vmin.xlane.f32.xlu0 %v174
    %v185 = vpop.xlane.xlu0 %184
    %186 = vmin.xlane.f32.xlu0 %v175
    %v187 = vpop.xlane.xlu0 %186
    %188 = vmin.xlane.f32.xlu0 %v176
    %v189 = vpop.xlane.xlu0 %188
    %190 = vmin.xlane.f32.xlu0 %v177
    %v191 = vpop.xlane.xlu0 %190
    %192 = vmin.xlane.f32.xlu0 %v178
    %v193 = vpop.xlane.xlu0 %192
    %194 = vmin.xlane.f32.xlu0 %v179
    %v195 = vpop.xlane.xlu0 %194
    %v196 = vlaneseq
    %v197 = vand.u32 %v196, 127
    %vm198 = vcmp.eq.f32.partialorder %v172, %v181
    %vm199 = vcmp.eq.f32.partialorder %v173, %v183
    %vm200 = vcmp.eq.f32.partialorder %v174, %v185
    %vm201 = vcmp.eq.f32.partialorder %v175, %v187
    %vm202 = vcmp.eq.f32.partialorder %v176, %v189
    %vm203 = vcmp.eq.f32.partialorder %v177, %v191
    %vm204 = vcmp.eq.f32.partialorder %v178, %v193
    %vm205 = vcmp.eq.f32.partialorder %v179, %v195
    %v206 = vsel %vm198, %v197, 128
    %v207 = vsel %vm199, %v197, 128
    %v208 = vsel %vm200, %v197, 128
    %v209 = vsel %vm201, %v197, 128
    %v210 = vsel %vm202, %v197, 128
    %v211 = vsel %vm203, %v197, 128
    %v212 = vsel %vm204, %v197, 128
    %v213 = vsel %vm205, %v197, 128
    %v214 = vand.u32 %v206, 65535
    %v215 = vshra.s32 %v206, 16
    %v216 = vcvt.s32.f32 %v214
    %v217 = vcvt.s32.f32 %v215
    %218 = vmin.xlane.f32.xlu0 %v217
    %v219 = vpop.xlane.xlu0 %218
    %vm220 = vcmp.eq.f32.partialorder %v217, %v219
    %v221 = vsel %vm220, %v216, inf
    %222 = vmin.xlane.f32.xlu0 %v221
    %v223 = vpop.xlane.xlu0 %222
    %v224 = vcvt.f32.s32 %v223
    %v225 = vcvt.f32.s32 %v219
    %v226 = vshll.u32 %v225, 16
    %v227 = vadd.s32 %v226, %v224
    %v228 = vand.u32 %v207, 65535
    %v229 = vshra.s32 %v207, 16
    %v230 = vcvt.s32.f32 %v228
    %v231 = vcvt.s32.f32 %v229
    %232 = vmin.xlane.f32.xlu0 %v231
    %v233 = vpop.xlane.xlu0 %232
    %vm234 = vcmp.eq.f32.partialorder %v231, %v233
    %v235 = vsel %vm234, %v230, inf
    %236 = vmin.xlane.f32.xlu0 %v235
    %v237 = vpop.xlane.xlu0 %236
    %v238 = vcvt.f32.s32 %v237
    %v239 = vcvt.f32.s32 %v233
    %v240 = vshll.u32 %v239, 16
    %v241 = vadd.s32 %v240, %v238
    %v242 = vand.u32 %v208, 65535
    %v243 = vshra.s32 %v208, 16
    %v244 = vcvt.s32.f32 %v242
    %v245 = vcvt.s32.f32 %v243
    %246 = vmin.xlane.f32.xlu0 %v245
    %v247 = vpop.xlane.xlu0 %246
    %vm248 = vcmp.eq.f32.partialorder %v245, %v247
    %v249 = vsel %vm248, %v244, inf
    %250 = vmin.xlane.f32.xlu0 %v249
    %v251 = vpop.xlane.xlu0 %250
    %v252 = vcvt.f32.s32 %v251
    %v253 = vcvt.f32.s32 %v247
    %v254 = vshll.u32 %v253, 16
    %v255 = vadd.s32 %v254, %v252
    %v256 = vand.u32 %v209, 65535
    %v257 = vshra.s32 %v209, 16
    %v258 = vcvt.s32.f32 %v256
    %v259 = vcvt.s32.f32 %v257
    %260 = vmin.xlane.f32.xlu0 %v259
    %v261 = vpop.xlane.xlu0 %260
    %vm262 = vcmp.eq.f32.partialorder %v259, %v261
    %v263 = vsel %vm262, %v258, inf
    %264 = vmin.xlane.f32.xlu0 %v263
    %v265 = vpop.xlane.xlu0 %264
    %v266 = vcvt.f32.s32 %v265
    %v267 = vcvt.f32.s32 %v261
    %v268 = vshll.u32 %v267, 16
    %v269 = vadd.s32 %v268, %v266
    %v270 = vand.u32 %v210, 65535
    %v271 = vshra.s32 %v210, 16
    %v272 = vcvt.s32.f32 %v270
    %v273 = vcvt.s32.f32 %v271
    %274 = vmin.xlane.f32.xlu0 %v273
    %v275 = vpop.xlane.xlu0 %274
    %vm276 = vcmp.eq.f32.partialorder %v273, %v275
    %v277 = vsel %vm276, %v272, inf
    %278 = vmin.xlane.f32.xlu0 %v277
    %v279 = vpop.xlane.xlu0 %278
    %v280 = vcvt.f32.s32 %v279
    %v281 = vcvt.f32.s32 %v275
    %v282 = vshll.u32 %v281, 16
    %v283 = vadd.s32 %v282, %v280
    %v284 = vand.u32 %v211, 65535
    %v285 = vshra.s32 %v211, 16
    %v286 = vcvt.s32.f32 %v284
    %v287 = vcvt.s32.f32 %v285
    %288 = vmin.xlane.f32.xlu0 %v287
    %v289 = vpop.xlane.xlu0 %288
    %vm290 = vcmp.eq.f32.partialorder %v287, %v289
    %v291 = vsel %vm290, %v286, inf
    %292 = vmin.xlane.f32.xlu0 %v291
    %v293 = vpop.xlane.xlu0 %292
    %v294 = vcvt.f32.s32 %v293
    %v295 = vcvt.f32.s32 %v289
    %v296 = vshll.u32 %v295, 16
    %v297 = vadd.s32 %v296, %v294
    %v298 = vand.u32 %v212, 65535
    %v299 = vshra.s32 %v212, 16
    %v300 = vcvt.s32.f32 %v298
    %v301 = vcvt.s32.f32 %v299
    %302 = vmin.xlane.f32.xlu0 %v301
    %v303 = vpop.xlane.xlu0 %302
    %vm304 = vcmp.eq.f32.partialorder %v301, %v303
    %v305 = vsel %vm304, %v300, inf
    %306 = vmin.xlane.f32.xlu0 %v305
    %v307 = vpop.xlane.xlu0 %306
    %v308 = vcvt.f32.s32 %v307
    %v309 = vcvt.f32.s32 %v303
    %v310 = vshll.u32 %v309, 16
    %v311 = vadd.s32 %v310, %v308
    %v312 = vand.u32 %v213, 65535
    %v313 = vshra.s32 %v213, 16
    %v314 = vcvt.s32.f32 %v312
    %v315 = vcvt.s32.f32 %v313
    %316 = vmin.xlane.f32.xlu0 %v315
    %v317 = vpop.xlane.xlu0 %316
    %vm318 = vcmp.eq.f32.partialorder %v315, %v317
    %v319 = vsel %vm318, %v314, inf
    %320 = vmin.xlane.f32.xlu0 %v319
    %v321 = vpop.xlane.xlu0 %320
    %v322 = vcvt.f32.s32 %v321
    %v323 = vcvt.f32.s32 %v317
    %v324 = vshll.u32 %v323, 16
    %v325 = vadd.s32 %v324, %v322
    %v326 = vlaneseq
    %v327 = vshrl.u32 %v326, 7
    %v328 = vsub.s32 %v197, %v327
    %v329 = vrot.slane %v227, %v328
    %v330 = vadd.s32 %v197, 4294967288
    %v331 = vlaneseq
    %v332 = vshrl.u32 %v331, 7
    %v333 = vsub.s32 %v330, %v332
    %v334 = vrot.slane %v241, %v333
    %vm335 = vcmask 130112
    %v336 = vsel %vm335, %v334, %v329
    %v337 = vadd.s32 %v197, 4294967280
    %v338 = vlaneseq
    %v339 = vshrl.u32 %v338, 7
    %v340 = vsub.s32 %v337, %v339
    %v341 = vrot.slane %v255, %v340
    %vm342 = vcmask 195712
    %v343 = vsel %vm342, %v341, %v336
    %v344 = vadd.s32 %v197, 4294967272
    %v345 = vlaneseq
    %v346 = vshrl.u32 %v345, 7
    %v347 = vsub.s32 %v344, %v346
    %v348 = vrot.slane %v269, %v347
    %vm349 = vcmask 261312
    %v350 = vsel %vm349, %v348, %v343
    %v351 = vadd.s32 %v197, 4294967264
    %v352 = vlaneseq
    %v353 = vshrl.u32 %v352, 7
    %v354 = vsub.s32 %v351, %v353
    %v355 = vrot.slane %v283, %v354
    %vm356 = vcmask 326912
    %v357 = vsel %vm356, %v355, %v350
    %v358 = vadd.s32 %v197, 4294967256
    %v359 = vlaneseq
    %v360 = vshrl.u32 %v359, 7
    %v361 = vsub.s32 %v358, %v360
    %v362 = vrot.slane %v297, %v361
    %vm363 = vcmask 392512
    %v364 = vsel %vm363, %v362, %v357
    %v365 = vadd.s32 %v197, 4294967248
    %v366 = vlaneseq
    %v367 = vshrl.u32 %v366, 7
    %v368 = vsub.s32 %v365, %v367
    %v369 = vrot.slane %v311, %v368
    %vm370 = vcmask 458112
    %v371 = vsel %vm370, %v369, %v364
    %v372 = vadd.s32 %v197, 4294967240
    %v373 = vlaneseq
    %v374 = vshrl.u32 %v373, 7
    %v375 = vsub.s32 %v372, %v374
    %v376 = vrot.slane %v325, %v375
    %vm377 = vcmask 523712
    %v378 = vsel %vm377, %v376, %v371
    %vm379 = vcmask 516096
    %380 = vst.msk [vmem:[#allocation2] sm:$0x1] %vm379, %v378
    // Predicated region
    $region14: #{tpu_custom_call.1} parent=1 // pred_check
      _
    $region15: #{tpu_custom_call.1} parent=1 // pred_check_branch
      %382 = sbr.rel (0) target = $region17
    $region16: #{tpu_custom_call.1} parent=1 // pred_region
      %s384 = ssub.s32 16, 16
      %385 = vsyncadd [#allocation3], %s384
      %s387 = sshll.u32 [#allocation2], 4
      %s388 = int_to_ptr.vmem [resolvable:$true] %s387
      %390 = dma.vmem_to_hbm [thread:$0]  %s388, 16, %s3, [#allocation3]
    $region17: #{tpu_custom_call.1} parent=1 // pred_fallthru
      _
    // Predicated region
    $region18: #{tpu_custom_call.1} parent=1 // pred_check
      _
    $region19: #{tpu_custom_call.1} parent=1 // pred_check_branch
      %392 = sbr.rel (0) target = $region21
    $region20: #{tpu_custom_call.1} parent=1 // pred_region
      %393 = dma.done [#allocation3], 16
    $region21: #{tpu_custom_call.1} parent=1 // pred_fallthru
      _
    %394 = vsyncpa [#allocation3], 1

</llo_original>
